<compile_context>
chip_gen: v5e
topology: v5e:2x2
jax: 0.10.0
libtpu: 0.0.40
codegen_flags: <defaults>
</compile_context>

<pallas_src>
import functools

import jax
import jax.numpy as jnp
from jax.experimental import pallas as pl
from jax.experimental.pallas import tpu as pltpu

_LANE = 128


def _sublanes(dtype) -> int:
    # 8 sublanes of 32-bit; sub-32-bit dtypes pack along the sublane axis.
    return max(8, 32 // jnp.dtype(dtype).itemsize)


def _default_block_bytes() -> int:
    # Per-block DMA target. Double-buffered in+out = 4x block must fit the default scoped-VMEM
    # limit: 16 MiB (v5e), 32 MiB (v6e/v7x); v7x physical VMEM is 64 MiB/TC so 24 MiB is safe.
    kind = ""
    try:
        kind = jax.devices()[0].device_kind.lower()
    except Exception:  # pragma: no cover
        pass
    if "v6" in kind or "v7" in kind:
        return 6 * 1024 * 1024
    return 3 * 1024 * 1024


def _choose_t_hw(hw: int, max_t: int) -> int:
    """Pick the lane tile along the spatial axis: multiple of 128, or the full extent."""
    if hw <= max_t or hw <= _LANE:
        return hw
    top = max(_LANE, (max_t // _LANE) * _LANE)
    lo = max(_LANE, top // 2)
    best, best_score = top, (-1, -1, 0)
    t = top
    while t >= lo:
        nt = -(-hw // t)
        # Prefer exact divisors (no masked edge tile), then an even tile count (so v7x's two
        # TensorCores split the parallel spatial axis evenly), then the largest tile.
        score = (int(hw % t == 0), int(nt % 2 == 0), t)
        if score > best_score:
            best_score, best = score, t
        t -= _LANE
    return best


def _conv1x1_kernel(w_ref, x_ref, o_ref, *, b_blk):
    """One (batch-block, spatial-tile) per grid step.

    w_ref: (C2, C2)            -- (block-diagonal) channel-mixing matrix, grid-invariant, f32
    x_ref: (b_blk, C2, t_hw)   -- channels on sublanes, spatial tile on lanes
    o_ref: (b_blk, C2, t_hw)
    """
    w = w_ref[...]
    for b in range(b_blk):  # short static unroll; b_blk == 1 unless images are tiny
        o_ref[b] = jnp.dot(w, x_ref[b], preferred_element_type=jnp.float32).astype(o_ref.dtype)


def invertible_conv1x1(z, weight, logdet=None, reverse=False, block_bytes=None):
    """z: (N, C, H, W) NCHW, weight: (C, C). Returns (z_out, logdet)."""
    N, C, H, W = z.shape
    HW = H * W
    pixels = HW
    itemsize = jnp.dtype(z.dtype).itemsize

    # Parameter glue (tiny CxC linear algebra) stays in plain JAX.
    dlogdet = jnp.linalg.slogdet(weight)[1].astype(jnp.float32) * pixels
    if reverse:
        # TODO(synk): PyTorch inverts in float64; TPUs have no native f64, so use an f32 LU solve.
        w_eff = jnp.linalg.solve(weight, jnp.eye(C, dtype=weight.dtype))
    else:
        w_eff = weight
    # Keep the weight in f32 (no lossy bf16 cast of inv(W)); MXU mixing + f32 accumulation handle it.
    w_eff = w_eff.astype(jnp.float32)

    # Fold batch elements into the channel axis (block-diagonal weight) when C underfills the
    # packed sublane count for this dtype: densifies sublanes instead of stacking half-empty slabs.
    sub = _sublanes(z.dtype)
    f = 1
    if C < sub:
        f = min(N, max(1, sub // C))
        while N % f != 0:
            f -= 1
    N2, C2 = N // f, f * C
    w2 = w_eff if f == 1 else jnp.kron(jnp.eye(f, dtype=jnp.float32), w_eff)

    x = z.reshape(N2, C2, HW)  # free row-major regrouping of contiguous (N, C, H, W)

    # Block sizing: multi-MiB DMA blocks to amortize the ~0.35 us per-grid-step overhead.
    target = block_bytes if block_bytes is not None else _default_block_bytes()
    row_bytes = C2 * HW * itemsize
    if row_bytes >= target:
        b_blk = 1
        t_hw = _choose_t_hw(HW, max(1, target // (C2 * itemsize)))
    else:
        # Small images: take the whole spatial extent and fold batch elements into the block.
        t_hw = HW
        b_blk = min(N2, max(1, target // row_bytes))
        while N2 % b_blk != 0:
            b_blk -= 1

    grid = (N2 // b_blk, pl.cdiv(HW, t_hw))

    cost = pl.CostEstimate(
        flops=2 * N * C * C * HW,
        transcendentals=0,
        bytes_accessed=2 * N * C * HW * itemsize + C2 * C2 * 4,
    )

    out = pl.pallas_call(
        functools.partial(_conv1x1_kernel, b_blk=b_blk),
        out_shape=jax.ShapeDtypeStruct((N2, C2, HW), z.dtype),
        grid_spec=pltpu.PrefetchScalarGridSpec(
            num_scalar_prefetch=0,
            grid=grid,
            in_specs=[
                pl.BlockSpec((C2, C2), lambda nb, s: (0, 0)),              # weight, grid-invariant
                pl.BlockSpec((b_blk, C2, t_hw), lambda nb, s: (nb, 0, s)),
            ],
            out_specs=pl.BlockSpec((b_blk, C2, t_hw), lambda nb, s: (nb, 0, s)),
        ),
        compiler_params=pltpu.CompilerParams(
            dimension_semantics=("parallel", "parallel"),
        ),
        cost_estimate=cost,
    )(w2, x)

    z_out = out.reshape(N, C, H, W)

    if logdet is not None:
        logdet = logdet + dlogdet if not reverse else logdet - dlogdet
    return z_out, logdet


if __name__ == "__main__":
    key = jax.random.PRNGKey(0)
    kw, kz, kw2, kz2 = jax.random.split(key, 4)

    # --- Case 1: module-default small shapes (N=2, C=4, 16x16), f32 ---
    num_channels = 4
    N, H, W = 2, 16, 16
    # Deterministic init mirroring the module: orthogonal matrix from QR of a random normal.
    w_init = jnp.linalg.qr(
        jax.random.normal(kw, (num_channels, num_channels), dtype=jnp.float32)
    )[0]
    z = jax.random.normal(kz, (N, num_channels, H, W), dtype=jnp.float32)
    logdet = jnp.zeros((N,), dtype=jnp.float32)

    z_out, logdet_out = invertible_conv1x1(z, w_init, logdet=logdet, reverse=False)
    jax.block_until_ready((z_out, logdet_out))

    ref_z = jnp.einsum("oc,nchw->nohw", w_init, z)
    ref_ld = logdet + jnp.linalg.slogdet(w_init)[1] * (H * W)
    assert jnp.allclose(z_out, ref_z, atol=1e-5), "conv1x1 mismatch"
    assert jnp.allclose(logdet_out, ref_ld, atol=1e-4), "logdet mismatch"

    # Reverse path round-trips forward.
    z_rec, logdet_rec = invertible_conv1x1(z_out, w_init, logdet=logdet_out, reverse=True)
    jax.block_until_ready((z_rec, logdet_rec))
    assert jnp.allclose(z_rec, z, atol=1e-4), "reverse conv1x1 mismatch"
    assert jnp.allclose(logdet_rec, logdet, atol=1e-4), "reverse logdet mismatch"

    # --- Case 2: HW not a multiple of 128 with forced spatial tiling (exercises the masked
    # edge tile that replaced the old wrapper-side pad/crop round trip) ---
    C2_, N2_, H2_, W2_ = 8, 2, 24, 24
    w2_init = jnp.linalg.qr(jax.random.normal(kw2, (C2_, C2_), dtype=jnp.float32))[0]
    z2 = jax.random.normal(kz2, (N2_, C2_, H2_, W2_), dtype=jnp.float32)
    z2_out, _ = invertible_conv1x1(z2, w2_init, logdet=None, reverse=False, block_bytes=8192)
    jax.block_until_ready(z2_out)
    ref_z2 = jnp.einsum("oc,nchw->nohw", w2_init, z2)
    assert jnp.allclose(z2_out, ref_z2, atol=1e-5), "edge-tile conv1x1 mismatch"

    # --- Case 3: bf16 activations (dtype-aware sublane fold: 16 sublanes for bf16) ---
    z_bf = z.astype(jnp.bfloat16)
    z_bf_out, _ = invertible_conv1x1(z_bf, w_init, logdet=None, reverse=False)
    jax.block_until_ready(z_bf_out)
    assert jnp.allclose(z_bf_out.astype(jnp.float32), ref_z, atol=0.1), "bf16 conv1x1 mismatch"

    print("KERNEL_OK")
</pallas_src>

<mosaic_0001>
module attributes {stable_mosaic.version = 11 : i64} {
  func.func @_conv1x1_kernel(%arg0: i32, %arg1: i32, %arg2: memref<8x8xf32, #tpu.memory_space<vmem>>, %arg3: memref<1x8x256xf32, #tpu.memory_space<vmem>>, %arg4: memref<1x8x256xf32, #tpu.memory_space<vmem>>) attributes {dimension_semantics = [#tpu.dimension_semantics<parallel>, #tpu.dimension_semantics<parallel>], iteration_bounds = array<i64: 1, 1>, scalar_prefetch = 0 : i64, scratch_operands = 0 : i64, tpu.core_type = #tpu.core_type<tc>, window_params = [{pipeline_mode = #tpu.pipeline_mode<synchronous>, transform_indices = @transform_0, window_bounds = array<i64: 8, 8>}, {transform_indices = @transform_1, window_bounds = array<i64: 1, 8, 256>}, {transform_indices = @transform_2, window_bounds = array<i64: 1, 8, 256>}]} {
    %c0 = arith.constant 0 : index
    %c0_0 = arith.constant 0 : index
    %0 = vector.load %arg2[%c0, %c0_0] : memref<8x8xf32, #tpu.memory_space<vmem>>, vector<8x8xf32>
    %c0_1 = arith.constant 0 : index
    %c0_2 = arith.constant 0 : index
    %c0_3 = arith.constant 0 : index
    %1 = vector.load %arg3[%c0_1, %c0_2, %c0_3] : memref<1x8x256xf32, #tpu.memory_space<vmem>>, vector<1x8x256xf32>
    %2 = vector.shape_cast %1 : vector<1x8x256xf32> to vector<8x256xf32>
    %cst = arith.constant dense<0.000000e+00> : vector<8x256xf32>
    %3 = tpu.matmul %0, %2, %cst {dimension_numbers = #tpu.dot_dimension_numbers<[1], [0], [0], [1], [0, 0, 1, 1], [], []>} : vector<8x8xf32>, vector<8x256xf32>, vector<8x256xf32> -> vector<8x256xf32>
    %c0_4 = arith.constant 0 : index
    %c0_5 = arith.constant 0 : index
    %c0_6 = arith.constant 0 : index
    %4 = vector.load %arg4[%c0_4, %c0_5, %c0_6] : memref<1x8x256xf32, #tpu.memory_space<vmem>>, vector<1x8x256xf32>
    %5 = vector.shape_cast %4 : vector<1x8x256xf32> to vector<8x256xf32>
    %6 = vector.shape_cast %3 : vector<8x256xf32> to vector<1x8x256xf32>
    tpu.vector_store %arg4[%c0_4, %c0_5, %c0_6], %6 {strides = array<i32>} : memref<1x8x256xf32, #tpu.memory_space<vmem>>, vector<1x8x256xf32>,
    return
  }
  func.func @transform_0(%arg0: i32, %arg1: i32) -> (i32, i32) {
    %c0_i32 = arith.constant 0 : i32
    %c0_i32_0 = arith.constant 0 : i32
    %c0_i32_1 = arith.constant 0 : i32
    return %c0_i32, %c0_i32_0 : i32, i32
  }
  func.func @transform_1(%arg0: i32, %arg1: i32) -> (i32, i32, i32) {
    %c0_i32 = arith.constant 0 : i32
    %c0_i32_0 = arith.constant 0 : i32
    return %arg0, %c0_i32, %arg1 : i32, i32, i32
  }
  func.func @transform_2(%arg0: i32, %arg1: i32) -> (i32, i32, i32) {
    %c0_i32 = arith.constant 0 : i32
    %c0_i32_0 = arith.constant 0 : i32
    return %arg0, %c0_i32, %arg1 : i32, i32, i32
  }
}

</mosaic_0001>

<llo_original>
// kernel: tpu_custom_call.1
$region0: #{tpu_custom_call.1}
  #allocation0 [shape = 'u32[]', space=smem, size = 0x4, offset = 0x4, fixed_abs, tag = 'smem constant byte address 0x4 - core index']
  #allocation1 [shape = 'u32[72,128]{1,0:T(1,128)}', space=vmem, size = 0x9000, scoped, tag = 'internal scratch']
  %s0 = inlined_call_operand.hbm [shape: f32[8,8], index: 0, kind: input, shape index: {}]
  %s1 = inlined_call_operand.hbm [shape: f32[1,8,256], index: 1, kind: input, shape index: {}]
  %s2 = inlined_call_operand.hbm [shape: f32[1,8,256], index: 2, kind: output, shape index: {}]
  %s3 = sld [smem:[#allocation0]]
  $region26: #{tpu_custom_call.1} parent=0
    _
  %s5 = ssub.s32 1, %s3
  %s6 = scalar_select 0, %s5, %s3
  $region1: #{tpu_custom_call.1} parent=0
    #allocation2 [shape = 'u8[4096]{0}', space=vmem, size = 0x1000, scoped, tag = 'input window, operand 0, single buffered']
    #allocation3 [shape = 's32[1]{0}', space=sflag, size = 0x4, scoped, tag = 'scoped memory for tpu_custom_call.1']
    #allocation4 [shape = 's32[1]{0}', space=sflag, size = 0x4, scoped, tag = 'scoped memory for tpu_custom_call.1']
    #allocation5 [shape = 'u8[8192]{0}', space=vmem, size = 0x2000, scoped, tag = 'input window, operand 1, single buffered']
    #allocation6 [shape = 's32[1]{0}', space=sflag, size = 0x4, scoped, tag = 'scoped memory for tpu_custom_call.1']
    #allocation7 [shape = 'u8[8192]{0}', space=vmem, size = 0x2000, scoped, tag = 'output window, operand 0, single buffered']
    %7 = vsyncpa [#allocation3], 0
    %8 = vsyncpa [#allocation6], 0
    %9 = vsyncpa [#allocation4], 0
    // Predicated region
    $region2: #{tpu_custom_call.1} parent=1 // pred_check
      _
    $region3: #{tpu_custom_call.1} parent=1 // pred_check_branch
      %11 = sbr.rel (0) target = $region5
    $region4: #{tpu_custom_call.1} parent=1 // pred_region
      %13 = vsyncadd [#allocation3], 0
      %s15 = sshll.u32 %s0, 4
      %s16 = int_to_ptr.hbm [resolvable:$true] %s15
      %s17 = sshll.u32 [#allocation2], 4
      %s18 = int_to_ptr.vmem [resolvable:$true] %s17
      %20 = dma.hbm_to_vmem [thread:$0]  %s16, 128, %s18, [#allocation3]
    $region5: #{tpu_custom_call.1} parent=1 // pred_fallthru
      _
    // Predicated region
    $region6: #{tpu_custom_call.1} parent=1 // pred_check
      _
    $region7: #{tpu_custom_call.1} parent=1 // pred_check_branch
      %22 = sbr.rel (0) target = $region9
    $region8: #{tpu_custom_call.1} parent=1 // pred_region
      %24 = vsyncadd [#allocation6], 0
      %s26 = sshll.u32 %s1, 4
      %s27 = int_to_ptr.hbm [resolvable:$true] %s26
      %s28 = sshll.u32 [#allocation5], 4
      %s29 = int_to_ptr.vmem [resolvable:$true] %s28
      %31 = dma.hbm_to_vmem [thread:$0]  %s27, 256, %s29, [#allocation6]
    $region9: #{tpu_custom_call.1} parent=1 // pred_fallthru
      _
    // Predicated region
    $region10: #{tpu_custom_call.1} parent=1 // pred_check
      _
    $region11: #{tpu_custom_call.1} parent=1 // pred_check_branch
      %33 = sbr.rel (0) target = $region13
    $region12: #{tpu_custom_call.1} parent=1 // pred_region
      %35 = dma.done [#allocation3], 128
    $region13: #{tpu_custom_call.1} parent=1 // pred_fallthru
      _
    // Predicated region
    $region14: #{tpu_custom_call.1} parent=1 // pred_check
      _
    $region15: #{tpu_custom_call.1} parent=1 // pred_check_branch
      %37 = sbr.rel (0) target = $region17
    $region16: #{tpu_custom_call.1} parent=1 // pred_region
      %39 = dma.done [#allocation6], 256
    $region17: #{tpu_custom_call.1} parent=1 // pred_fallthru
      _
    %v40 = vld [vmem:[#allocation2] sm:$0xff]
    %v41 = vld [vmem:[#allocation5] sm:$0xff]
    %v42 = vld [vmem:[#allocation5 + $0x8] sm:$0xff]
    %vm43 = vcmask 64512
    %v45 = vsel %vm43, %v40, 0
    %47 = vmatpush.msra.mxu0 0.0
    %48 = vmatpush.msra.mxu0 0.0
    %49 = vmatpush.msra.mxu0 0.0
    %50 = vmatpush.msra.mxu0 0.0
    %51 = vmatpush.msra.mxu0 0.0
    %52 = vmatpush.msra.mxu0 0.0
    %53 = vmatpush.msra.mxu0 0.0
    %54 = vmatpush.msra.mxu0 0.0
    %55 = vmatpush.msra.mxu0 0.0
    %56 = vmatpush.msra.mxu0 0.0
    %57 = vmatpush.msra.mxu0 0.0
    %58 = vmatpush.msra.mxu0 0.0
    %59 = vmatpush.msra.mxu0 0.0
    %60 = vmatpush.msra.mxu0 0.0
    %61 = vmatpush.msra.mxu0 0.0
    %62 = vmatpush.msra.mxu0 %v41
    %63 = vmatmul.f32.gmra.mxu0 %v45
    %v64 = vpop.f32.mrf.mxu0
    %v65 = vadd.f32 0.0, %v64
    %66 = vdwg.mxu0
    %67 = vmatpush.msra.mxu0 0.0
    %68 = vmatpush.msra.mxu0 0.0
    %69 = vmatpush.msra.mxu0 0.0
    %70 = vmatpush.msra.mxu0 0.0
    %71 = vmatpush.msra.mxu0 0.0
    %72 = vmatpush.msra.mxu0 0.0
    %73 = vmatpush.msra.mxu0 0.0
    %74 = vmatpush.msra.mxu0 0.0
    %75 = vmatpush.msra.mxu0 0.0
    %76 = vmatpush.msra.mxu0 0.0
    %77 = vmatpush.msra.mxu0 0.0
    %78 = vmatpush.msra.mxu0 0.0
    %79 = vmatpush.msra.mxu0 0.0
    %80 = vmatpush.msra.mxu0 0.0
    %81 = vmatpush.msra.mxu0 0.0
    %82 = vmatpush.msra.mxu0 %v42
    %83 = vmatmul.f32.gmra.mxu0 %v45
    %v84 = vpop.f32.mrf.mxu0
    %v85 = vadd.f32 0.0, %v84
    %86 = vdwg.mxu0
    %87 = vst [vmem:[#allocation7] sm:$0xff] %v65
    %88 = vst [vmem:[#allocation7 + $0x8] sm:$0xff] %v85
    // Predicated region
    $region18: #{tpu_custom_call.1} parent=1 // pred_check
      _
    $region19: #{tpu_custom_call.1} parent=1 // pred_check_branch
      %90 = sbr.rel (0) target = $region21
    $region20: #{tpu_custom_call.1} parent=1 // pred_region
      %92 = vsyncadd [#allocation4], 0
      %s94 = sshll.u32 [#allocation7], 4
      %s95 = int_to_ptr.vmem [resolvable:$true] %s94
      %s96 = sshll.u32 %s2, 4
      %s97 = int_to_ptr.hbm [resolvable:$true] %s96
      %99 = dma.vmem_to_hbm [thread:$0]  %s95, 256, %s97, [#allocation4]
    $region21: #{tpu_custom_call.1} parent=1 // pred_fallthru
      _
    // Predicated region
    $region22: #{tpu_custom_call.1} parent=1 // pred_check
      _
    $region23: #{tpu_custom_call.1} parent=1 // pred_check_branch
      %101 = sbr.rel (0) target = $region25
    $region24: #{tpu_custom_call.1} parent=1 // pred_region
      %103 = dma.done [#allocation4], 256
    $region25: #{tpu_custom_call.1} parent=1 // pred_fallthru
      _
    %104 = vsyncpa [#allocation3], 1
    %105 = vsyncpa [#allocation6], 1
    %106 = vsyncpa [#allocation4], 1

</llo_original>
